<compile_context>
chip_gen: v7x
topology: tpu7x:2x2x1
jax: 0.10.0
libtpu: 0.0.40
codegen_flags: <defaults>
</compile_context>

<pallas_src>
import functools

import jax
import jax.numpy as jnp
from jax import lax
from jax.experimental import pallas as pl
from jax.experimental.pallas import tpu as pltpu

NUM_CLASSES = 3
GAMMA = 2.0
EPS = 1e-07
# Samples per grid step = TILE_GROUPS * 8 * 128.  64 -> 65536 samples (~1 MiB of f32 input
# per step, ~2 MiB double-buffered): big enough to amortise per-step overhead, small enough
# for the 16/32 MiB scoped-VMEM defaults on v5e/v6e/v7x without raising vmem_limit_bytes.
TILE_GROUPS = 64
_GROUP = 8 * 128  # samples per (sublane, lane) group


def _focal_loss_kernel(weight_sref, logits_ref, labels_ref, partial_ref,
                       *, n_total, tile_g, gamma):
    """One grid step over `tile_g` groups of 8x128 samples.

    weight_sref : SMEM [3] f32           (scalar-prefetched per-class weights)
    logits_ref  : VMEM [3, tile_g, 8, 128]
    labels_ref  : VMEM [1, tile_g, 8, 128] int32
    partial_ref : VMEM [1, 8, 128] f32   (per-tile partial sum, lane-dense)
    """
    pid = pl.program_id(0)
    last = pl.num_programs(0) - 1

    x = logits_ref[...].astype(jnp.float32)      # [3, tile_g, 8, 128]
    lab = labels_ref[0]                          # [tile_g, 8, 128] int32
    x0, x1, x2 = x[0], x[1], x[2]                # class slabs: pure elementwise from here on

    # softmax over the 3 classes — slab-wise VPU max/sub/add, EUP exp at full occupancy
    m = jnp.maximum(jnp.maximum(x0, x1), x2)
    e0 = jnp.exp(x0 - m)
    e1 = jnp.exp(x1 - m)
    e2 = jnp.exp(x2 - m)
    s = e0 + e1 + e2
    inv_s = pl.reciprocal(s, approx=True)        # EUP vrcp (own slot)
    inv_s = inv_s * (2.0 - s * inv_s)            # one Newton step (VPU) -> ~1e-8 rel error

    # one-hot selection of the label class via nested selects (no gather, no XLU).
    # Note: out-of-range labels fall through to class 2 here; PyTorch's one_hot would raise,
    # so that case is undefined behaviour for the reference module anyway.
    w0 = weight_sref[0]
    w1 = weight_sref[1]
    w2 = weight_sref[2]
    is0 = lab == 0
    is1 = lab == 1
    e_lab = jnp.where(is0, e0, jnp.where(is1, e1, e2))     # [tile_g, 8, 128]
    w_lab = jnp.where(is0, w0, jnp.where(is1, w1, w2))     # [tile_g, 8, 128]

    p_lab = e_lab * inv_s
    q = 1.0 - p_lab
    g = float(gamma)
    if g == 2.0:
        mod = q * q                              # explicit square: VPU only, no EUP pow
    elif g.is_integer() and 0.0 <= g <= 8.0:
        mod = jnp.ones_like(q)
        for _ in range(int(g)):                  # small unrolled multiply chain
            mod = mod * q
    else:
        mod = jnp.power(q, g)                    # fallback for non-integer gamma

    loss = -jnp.log(p_lab + EPS) * mod * w_lab   # [tile_g, 8, 128]

    # Only the last tile can contain padded / ragged-edge lanes; interior tiles skip masking.
    @pl.when(pid == last)
    def _():
        gi = lax.broadcasted_iota(jnp.int32, loss.shape, 0)
        si = lax.broadcasted_iota(jnp.int32, loss.shape, 1)
        li = lax.broadcasted_iota(jnp.int32, loss.shape, 2)
        idx = ((pid * tile_g + gi) * 8 + si) * 128 + li
        masked = jnp.where(idx < n_total, loss, 0.0)   # select 0.0 -> kills pad/garbage lanes
        partial_ref[...] = jnp.sum(masked, axis=0, keepdims=True)

    @pl.when(pid != last)
    def _():
        partial_ref[...] = jnp.sum(loss, axis=0, keepdims=True)   # VPU adds over tile_g slabs


def focal_loss(y_pred, labels, weight, gamma=GAMMA, tile_groups=TILE_GROUPS):
    """y_pred: [N, 3] float logits; labels: [N] int; weight: [3] float. Returns scalar."""
    n, c = y_pred.shape
    assert c == NUM_CLASSES

    if not jnp.issubdtype(y_pred.dtype, jnp.floating):
        y_pred = y_pred.astype(jnp.float32)
    # Keep bf16 logits as bf16 in HBM (halves traffic); upcast happens inside the kernel.

    # Layout plumbing: batch on the lane/sublane axes, classes on the leading axis.
    groups = pl.cdiv(n, _GROUP)
    n_pad = groups * _GROUP                      # pad only to the next 8*128 boundary
    logits_t = y_pred.T                                      # [C, N]
    labels_t = labels.astype(jnp.int32).reshape(1, n)        # [1, N]
    if n_pad != n:
        logits_t = jnp.pad(logits_t, ((0, 0), (0, n_pad - n)))
        labels_t = jnp.pad(labels_t, ((0, 0), (0, n_pad - n)))
    logits4 = logits_t.reshape(c, groups, 8, 128)            # free row-major reshape
    labels4 = labels_t.reshape(1, groups, 8, 128)
    weight_s = weight.astype(jnp.float32).reshape(c)         # -> SMEM via scalar prefetch

    tile_g = min(int(tile_groups), groups)
    num_tiles = pl.cdiv(groups, tile_g)

    kernel = functools.partial(_focal_loss_kernel,
                               n_total=n, tile_g=tile_g, gamma=gamma)

    partials = pl.pallas_call(
        kernel,
        out_shape=jax.ShapeDtypeStruct((num_tiles, 8, 128), jnp.float32),
        grid_spec=pltpu.PrefetchScalarGridSpec(
            num_scalar_prefetch=1,               # per-class weights -> SMEM scalars
            grid=(num_tiles,),
            in_specs=[
                pl.BlockSpec((c, tile_g, 8, 128), lambda i, w: (0, i, 0, 0)),
                pl.BlockSpec((1, tile_g, 8, 128), lambda i, w: (0, i, 0, 0)),
            ],
            out_specs=pl.BlockSpec((1, 8, 128), lambda i, w: (i, 0, 0)),
        ),
        compiler_params=pltpu.CompilerParams(
            dimension_semantics=("parallel",),   # disjoint per-tile outputs; megacore-safe
        ),
        cost_estimate=pl.CostEstimate(
            flops=int(25 * n),
            transcendentals=int(5 * n),          # 3 exp + log + rcp per sample
            bytes_accessed=int(n * (c * y_pred.dtype.itemsize + 4)
                               + num_tiles * 8 * 128 * 4),
        ),
    )(weight_s, logits4, labels4)

    return jnp.sum(partials) / jnp.float32(n)


def focal_loss_ref(y_pred, labels, weight, gamma=GAMMA):
    """Pure-JAX reference matching the PyTorch forward exactly."""
    p = jax.nn.softmax(y_pred.astype(jnp.float32), axis=1)
    target = jax.nn.one_hot(labels, NUM_CLASSES, dtype=p.dtype)
    ce = -jnp.log(p + EPS) * target
    floss = jnp.power(1.0 - p, gamma) * ce
    floss = floss * weight.reshape(1, -1)
    return jnp.mean(jnp.sum(floss, axis=1))


if __name__ == "__main__":
    key = jax.random.PRNGKey(0)
    k1, k2, k3, k4 = jax.random.split(key, 4)

    # Deterministic per-class weights (stand-in for the module's `weight` arg).
    weight = jnp.array([0.5, 1.0, 2.0], dtype=jnp.float32)

    # Small batch (single tile, heavy lane/sublane padding + masking path).
    N1 = 8
    y1 = jax.random.normal(k1, (N1, NUM_CLASSES), dtype=jnp.float32)
    l1 = jax.random.randint(k2, (N1,), 0, NUM_CLASSES, dtype=jnp.int32)
    out1 = jax.block_until_ready(focal_loss(y1, l1, weight))
    ref1 = focal_loss_ref(y1, l1, weight)
    assert jnp.allclose(out1, ref1, rtol=1e-4, atol=1e-6), (out1, ref1)

    # Ragged multi-tile batch (tile_groups=1 -> 2 grid steps: exercises the pipelined
    # "parallel" grid, the interior fast path, and last-tile masking).
    N2 = 1300
    y2 = jax.random.normal(k3, (N2, NUM_CLASSES), dtype=jnp.float32)
    l2 = jax.random.randint(k4, (N2,), 0, NUM_CLASSES, dtype=jnp.int32)
    out2 = jax.block_until_ready(focal_loss(y2, l2, weight, tile_groups=1))
    ref2 = focal_loss_ref(y2, l2, weight)
    assert jnp.allclose(out2, ref2, rtol=1e-4, atol=1e-6), (out2, ref2)

    print("KERNEL_OK")
</pallas_src>

<mosaic_0001>
module attributes {stable_mosaic.version = 11 : i64} {
  func.func @_focal_loss_kernel(%arg0: i32, %arg1: memref<3xf32, #tpu.memory_space<smem>>, %arg2: memref<3x1x8x128xf32, #tpu.memory_space<vmem>>, %arg3: memref<1x1x8x128xi32, #tpu.memory_space<vmem>>, %arg4: memref<1x8x128xf32, #tpu.memory_space<vmem>>) attributes {dimension_semantics = [#tpu.dimension_semantics<parallel>], iteration_bounds = array<i64: 1>, scalar_prefetch = 1 : i64, scratch_operands = 0 : i64, tpu.core_type = #tpu.core_type<tc>, window_params = [{transform_indices = @transform_0, window_bounds = array<i64: 3, 1, 8, 128>}, {transform_indices = @transform_1, window_bounds = array<i64: 1, 1, 8, 128>}, {transform_indices = @transform_2, window_bounds = array<i64: 1, 8, 128>}]} {
    %c0 = arith.constant 0 : index
    %c0_0 = arith.constant 0 : index
    %c0_1 = arith.constant 0 : index
    %c0_2 = arith.constant 0 : index
    %0 = vector.load %arg2[%c0, %c0_0, %c0_1, %c0_2] : memref<3x1x8x128xf32, #tpu.memory_space<vmem>>, vector<3x1x8x128xf32>
    %c0_3 = arith.constant 0 : index
    %c0_4 = arith.constant 0 : index
    %c0_5 = arith.constant 0 : index
    %c0_6 = arith.constant 0 : index
    %1 = vector.load %arg3[%c0_3, %c0_4, %c0_5, %c0_6] : memref<1x1x8x128xi32, #tpu.memory_space<vmem>>, vector<1x1x8x128xi32>
    %2 = vector.shape_cast %1 : vector<1x1x8x128xi32> to vector<1x8x128xi32>
    %3 = vector.extract_strided_slice %0 {offsets = [0, 0, 0, 0], sizes = [1, 1, 8, 128], strides = [1, 1, 1, 1]} : vector<3x1x8x128xf32> to vector<1x1x8x128xf32>
    %4 = vector.shape_cast %3 : vector<1x1x8x128xf32> to vector<1x8x128xf32>
    %5 = vector.extract_strided_slice %0 {offsets = [1, 0, 0, 0], sizes = [1, 1, 8, 128], strides = [1, 1, 1, 1]} : vector<3x1x8x128xf32> to vector<1x1x8x128xf32>
    %6 = vector.shape_cast %5 : vector<1x1x8x128xf32> to vector<1x8x128xf32>
    %7 = vector.extract_strided_slice %0 {offsets = [2, 0, 0, 0], sizes = [1, 1, 8, 128], strides = [1, 1, 1, 1]} : vector<3x1x8x128xf32> to vector<1x1x8x128xf32>
    %8 = vector.shape_cast %7 : vector<1x1x8x128xf32> to vector<1x8x128xf32>
    %9 = arith.maximumf %4, %6 : vector<1x8x128xf32>
    %10 = arith.maximumf %9, %8 : vector<1x8x128xf32>
    %11 = arith.subf %4, %10 : vector<1x8x128xf32>
    %12 = math.exp %11 : vector<1x8x128xf32>
    %13 = arith.subf %6, %10 : vector<1x8x128xf32>
    %14 = math.exp %13 : vector<1x8x128xf32>
    %15 = arith.subf %8, %10 : vector<1x8x128xf32>
    %16 = math.exp %15 : vector<1x8x128xf32>
    %17 = arith.addf %12, %14 : vector<1x8x128xf32>
    %18 = arith.addf %17, %16 : vector<1x8x128xf32>
    %19 = tpu.reciprocal %18 {approx = true} : vector<1x8x128xf32> -> vector<1x8x128xf32>
    %20 = arith.mulf %18, %19 : vector<1x8x128xf32>
    %cst = arith.constant 2.000000e+00 : f32
    %21 = vector.broadcast %cst : f32 to vector<1x8x128xf32>
    %22 = arith.subf %21, %20 : vector<1x8x128xf32>
    %23 = arith.mulf %19, %22 : vector<1x8x128xf32>
    %c0_7 = arith.constant 0 : index
    %24 = memref.load %arg1[%c0_7] : memref<3xf32, #tpu.memory_space<smem>>
    %c1 = arith.constant 1 : index
    %25 = memref.load %arg1[%c1] : memref<3xf32, #tpu.memory_space<smem>>
    %c2 = arith.constant 2 : index
    %26 = memref.load %arg1[%c2] : memref<3xf32, #tpu.memory_space<smem>>
    %c0_i32 = arith.constant 0 : i32
    %27 = vector.broadcast %c0_i32 : i32 to vector<1x8x128xi32>
    %28 = arith.cmpi eq, %2, %27 : vector<1x8x128xi32>
    %c1_i32 = arith.constant 1 : i32
    %29 = vector.broadcast %c1_i32 : i32 to vector<1x8x128xi32>
    %30 = arith.cmpi eq, %2, %29 : vector<1x8x128xi32>
    %31 = arith.select %30, %14, %16 : vector<1x8x128xi1>, vector<1x8x128xf32>
    %32 = arith.select %28, %12, %31 : vector<1x8x128xi1>, vector<1x8x128xf32>
    %33 = vector.broadcast %25 : f32 to vector<1x8x128xf32>
    %34 = vector.broadcast %26 : f32 to vector<1x8x128xf32>
    %35 = arith.select %30, %33, %34 : vector<1x8x128xi1>, vector<1x8x128xf32>
    %36 = vector.broadcast %24 : f32 to vector<1x8x128xf32>
    %37 = arith.select %28, %36, %35 : vector<1x8x128xi1>, vector<1x8x128xf32>
    %38 = arith.mulf %32, %23 : vector<1x8x128xf32>
    %cst_8 = arith.constant 1.000000e+00 : f32
    %39 = vector.broadcast %cst_8 : f32 to vector<1x8x128xf32>
    %40 = arith.subf %39, %38 : vector<1x8x128xf32>
    %41 = arith.mulf %40, %40 : vector<1x8x128xf32>
    %cst_9 = arith.constant 1.000000e-07 : f32
    %42 = vector.broadcast %cst_9 : f32 to vector<1x8x128xf32>
    %43 = arith.addf %38, %42 : vector<1x8x128xf32>
    %44 = math.log %43 : vector<1x8x128xf32>
    %cst_10 = arith.constant 0.000000e+00 : f32
    %45 = vector.broadcast %cst_10 : f32 to vector<1x8x128xf32>
    %46 = arith.subf %45, %44 : vector<1x8x128xf32>
    %47 = arith.mulf %46, %41 : vector<1x8x128xf32>
    %48 = arith.mulf %47, %37 : vector<1x8x128xf32>
    %c0_i32_11 = arith.constant 0 : i32
    %49 = arith.cmpi eq, %arg0, %c0_i32_11 : i32
    %50 = arith.extui %49 : i1 to i32
    %c0_i32_12 = arith.constant 0 : i32
    %51 = arith.cmpi ne, %50, %c0_i32_12 : i32
    scf.if %51 {
      %55 = tpu.iota {dimensions = array<i32: 0>} : vector<1x8x128xi32>
      %56 = tpu.iota {dimensions = array<i32: 1>} : vector<1x8x128xi32>
      %57 = tpu.iota {dimensions = array<i32: 2>} : vector<1x8x128xi32>
      %c1_i32_15 = arith.constant 1 : i32
      %58 = arith.muli %arg0, %c1_i32_15 : i32
      %59 = vector.broadcast %58 : i32 to vector<1x8x128xi32>
      %60 = arith.addi %59, %55 : vector<1x8x128xi32>
      %c8_i32 = arith.constant 8 : i32
      %61 = vector.broadcast %c8_i32 : i32 to vector<1x8x128xi32>
      %62 = arith.muli %60, %61 : vector<1x8x128xi32>
      %63 = arith.addi %62, %56 : vector<1x8x128xi32>
      %c128_i32 = arith.constant 128 : i32
      %64 = vector.broadcast %c128_i32 : i32 to vector<1x8x128xi32>
      %65 = arith.muli %63, %64 : vector<1x8x128xi32>
      %66 = arith.addi %65, %57 : vector<1x8x128xi32>
      %c8_i32_16 = arith.constant 8 : i32
      %67 = vector.broadcast %c8_i32_16 : i32 to vector<1x8x128xi32>
      %68 = arith.cmpi slt, %66, %67 : vector<1x8x128xi32>
      %cst_17 = arith.constant 0.000000e+00 : f32
      %69 = vector.broadcast %cst_17 : f32 to vector<1x8x128xf32>
      %70 = arith.select %68, %48, %69 : vector<1x8x128xi1>, vector<1x8x128xf32>
      %cst_18 = arith.constant dense<0.000000e+00> : vector<8x128xf32>
      %71 = vector.multi_reduction <add>, %70, %cst_18 [0] : vector<1x8x128xf32> to vector<8x128xf32>
      %72 = vector.shape_cast %71 : vector<8x128xf32> to vector<1x8x128xf32>
      %c0_19 = arith.constant 0 : index
      %c0_20 = arith.constant 0 : index
      %c0_21 = arith.constant 0 : index
      %73 = vector.load %arg4[%c0_19, %c0_20, %c0_21] : memref<1x8x128xf32, #tpu.memory_space<vmem>>, vector<1x8x128xf32>
      tpu.vector_store %arg4[%c0_19, %c0_20, %c0_21], %72 {strides = array<i32>} : memref<1x8x128xf32, #tpu.memory_space<vmem>>, vector<1x8x128xf32>,
    } else {
    }
    %c0_i32_13 = arith.constant 0 : i32
    %52 = arith.cmpi ne, %arg0, %c0_i32_13 : i32
    %53 = arith.extui %52 : i1 to i32
    %c0_i32_14 = arith.constant 0 : i32
    %54 = arith.cmpi ne, %53, %c0_i32_14 : i32
    scf.if %54 {
      %cst_15 = arith.constant dense<0.000000e+00> : vector<8x128xf32>
      %55 = vector.multi_reduction <add>, %48, %cst_15 [0] : vector<1x8x128xf32> to vector<8x128xf32>
      %56 = vector.shape_cast %55 : vector<8x128xf32> to vector<1x8x128xf32>
      %c0_16 = arith.constant 0 : index
      %c0_17 = arith.constant 0 : index
      %c0_18 = arith.constant 0 : index
      %57 = vector.load %arg4[%c0_16, %c0_17, %c0_18] : memref<1x8x128xf32, #tpu.memory_space<vmem>>, vector<1x8x128xf32>
      tpu.vector_store %arg4[%c0_16, %c0_17, %c0_18], %56 {strides = array<i32>} : memref<1x8x128xf32, #tpu.memory_space<vmem>>, vector<1x8x128xf32>,
    } else {
    }
    return
  }
  func.func @transform_0(%arg0: i32, %arg1: memref<3xf32, #tpu.memory_space<smem>>) -> (i32, i32, i32, i32) {
    %c0_i32 = arith.constant 0 : i32
    %c0_i32_0 = arith.constant 0 : i32
    %c0_i32_1 = arith.constant 0 : i32
    %c0_i32_2 = arith.constant 0 : i32
    return %c0_i32, %arg0, %c0_i32_0, %c0_i32_1 : i32, i32, i32, i32
  }
  func.func @transform_1(%arg0: i32, %arg1: memref<3xf32, #tpu.memory_space<smem>>) -> (i32, i32, i32, i32) {
    %c0_i32 = arith.constant 0 : i32
    %c0_i32_0 = arith.constant 0 : i32
    %c0_i32_1 = arith.constant 0 : i32
    %c0_i32_2 = arith.constant 0 : i32
    return %c0_i32, %arg0, %c0_i32_0, %c0_i32_1 : i32, i32, i32, i32
  }
  func.func @transform_2(%arg0: i32, %arg1: memref<3xf32, #tpu.memory_space<smem>>) -> (i32, i32, i32) {
    %c0_i32 = arith.constant 0 : i32
    %c0_i32_0 = arith.constant 0 : i32
    %c0_i32_1 = arith.constant 0 : i32
    return %arg0, %c0_i32, %c0_i32_0 : i32, i32, i32
  }
}

</mosaic_0001>

<llo_original>
// kernel: tpu_custom_call.1
$region0: #{tpu_custom_call.1}
  #allocation0 [shape = 'u32[]', space=smem, size = 0x4, offset = 0x4, fixed_abs, tag = 'smem constant byte address 0x4 - core index']
  #allocation1 [shape = 'u32[144,128]{1,0:T(1,128)}', space=vmem, size = 0x12000, scoped, tag = 'internal scratch']
  #allocation2 [shape = 's32[1]{0}', space=sflag, size = 0x4, scoped, tag = 'scoped memory for tpu_custom_call.1']
  #allocation3 [shape = 'u8[512]{0}', space=smem, size = 0x200, scoped, tag = 'prefetched SMEM operand 0']
  %s0 = inlined_call_operand.hbm [shape: f32[3], index: 0, kind: input, shape index: {}]
  %s1 = inlined_call_operand.hbm [shape: f32[3,1,8,128], index: 1, kind: input, shape index: {}]
  %s2 = inlined_call_operand.hbm [shape: s32[1,1,8,128], index: 2, kind: input, shape index: {}]
  %s3 = inlined_call_operand.hbm [shape: f32[1,8,128], index: 3, kind: output, shape index: {}]
  %s4 = sld [smem:[#allocation0]]
  $region34: #{tpu_custom_call.1} parent=0
    _
  %s6 = ssub.s32 1, %s4
  %s7 = scalar_select 0, %s6, %s4
  %9 = dma.hbm_to_smem %s0, 16, [#allocation3], [#allocation2]
  %10 = dma.done [#allocation2], 16
  %11 = sfence
  $region1: #{tpu_custom_call.1} parent=0
    #allocation4 [shape = 'u8[12288]{0}', space=vmem, size = 0x3000, scoped, tag = 'input window, operand 1, single buffered']
    #allocation5 [shape = 's32[1]{0}', space=sflag, size = 0x4, scoped, tag = 'scoped memory for tpu_custom_call.1']
    #allocation6 [shape = 's32[1]{0}', space=sflag, size = 0x4, scoped, tag = 'scoped memory for tpu_custom_call.1']
    #allocation7 [shape = 'u8[4096]{0}', space=vmem, size = 0x1000, scoped, tag = 'input window, operand 2, single buffered']
    #allocation8 [shape = 's32[1]{0}', space=sflag, size = 0x4, scoped, tag = 'scoped memory for tpu_custom_call.1']
    #allocation9 [shape = 'u8[4096]{0}', space=vmem, size = 0x1000, scoped, tag = 'output window, operand 0, single buffered']
    %12 = vsyncpa [#allocation5], 0
    %13 = vsyncpa [#allocation8], 0
    %14 = vsyncpa [#allocation6], 0
    // Predicated region
    $region2: #{tpu_custom_call.1} parent=1 // pred_check
      _
    $region3: #{tpu_custom_call.1} parent=1 // pred_check_branch
      %16 = sbr.rel (0) target = $region5
    $region4: #{tpu_custom_call.1} parent=1 // pred_region
      %s18 = ssub.s32 384, 384
      %19 = vsyncadd [#allocation5], %s18
      %s20 = sshll.u32 [#allocation4], 4
      %s21 = int_to_ptr.vmem [resolvable:$true] %s20
      %26 = dma.hbm_to_vmem [thread:$0]  %s1, 384, %s21, [#allocation5], 128, 128, 8
    $region5: #{tpu_custom_call.1} parent=1 // pred_fallthru
      _
    // Predicated region
    $region6: #{tpu_custom_call.1} parent=1 // pred_check
      _
    $region7: #{tpu_custom_call.1} parent=1 // pred_check_branch
      %28 = sbr.rel (0) target = $region9
    $region8: #{tpu_custom_call.1} parent=1 // pred_region
      %s30 = ssub.s32 128, 128
      %31 = vsyncadd [#allocation8], %s30
      %s33 = sshll.u32 [#allocation7], 4
      %s34 = int_to_ptr.vmem [resolvable:$true] %s33
      %36 = dma.hbm_to_vmem [thread:$0]  %s2, 128, %s34, [#allocation8]
    $region9: #{tpu_custom_call.1} parent=1 // pred_fallthru
      _
    // Predicated region
    $region10: #{tpu_custom_call.1} parent=1 // pred_check
      _
    $region11: #{tpu_custom_call.1} parent=1 // pred_check_branch
      %38 = sbr.rel (0) target = $region13
    $region12: #{tpu_custom_call.1} parent=1 // pred_region
      %39 = dma.done [#allocation5], 384
    $region13: #{tpu_custom_call.1} parent=1 // pred_fallthru
      _
    // Predicated region
    $region14: #{tpu_custom_call.1} parent=1 // pred_check
      _
    $region15: #{tpu_custom_call.1} parent=1 // pred_check_branch
      %41 = sbr.rel (0) target = $region17
    $region16: #{tpu_custom_call.1} parent=1 // pred_region
      %42 = dma.done [#allocation8], 128
    $region17: #{tpu_custom_call.1} parent=1 // pred_fallthru
      _
    %v43 = vld [vmem:[#allocation4] sm:$0xff]
    %v44 = vld [vmem:[#allocation4 + $0x8] sm:$0xff]
    %v45 = vld [vmem:[#allocation4 + $0x10] sm:$0xff]
    %v46 = vld [vmem:[#allocation7] sm:$0xff]
    %v47 = vmax.f32 %v43, %v44
    %v48 = vmax.f32 %v47, %v45
    %v49 = vsub.f32 %v43, %v48
    %v50 = vmul.f32 %v49, 1.442695
    %v51 = vpow.pop %v50
    %v52 = vsub.f32 %v44, %v48
    %v53 = vmul.f32 %v52, 1.442695
    %v54 = vpow.pop %v53
    %v55 = vsub.f32 %v45, %v48
    %v56 = vmul.f32 %v55, 1.442695
    %v57 = vpow.pop %v56
    %v58 = vadd.f32 %v51, %v54
    %v59 = vadd.f32 %v58, %v57
    %v60 = vrcp.pop %v59
    %v61 = vmul.f32 %v59, %v60
    %v62 = vsub.f32 2.0, %v61
    %v63 = vmul.f32 %v60, %v62
    %s64 = sld [smem:[#allocation3]]
    %s65 = sld [smem:[#allocation3 + $0x1]]
    %s66 = sld [smem:[#allocation3 + $0x2]]
    %vm67 = vcmp.eq.s32.totalorder %v46, 0
    %vm68 = vcmp.eq.s32.totalorder %v46, 1
    %v69 = vsel %vm68, %v54, %v57
    %v70 = vsel %vm67, %v51, %v69
    %v71 = vstv %s65
    %v72 = vstv %s66
    %v73 = vsel %vm68, %v71, %v72
    %v74 = vstv %s64
    %v75 = vsel %vm67, %v74, %v73
    %v76 = vmul.f32 %v70, %v63
    %v77 = vsub.f32 1.0, %v76
    %v78 = vmul.f32 %v77, %v77
    %v79 = vadd.f32 %v76, 1e-07
    %v80 = vlog2.pop %v79
    %v81 = vmul.f32 %v80, 0.6931472
    %v82 = vsub.f32 0.0, %v81
    %v83 = vmul.f32 %v82, %v78
    %v84 = vmul.f32 %v83, %v75
    %p85 = scmp.eq.s32.totalorder 0, 0
    // Predicated region
    $region18: #{tpu_custom_call.1} parent=1 // pred_check
      %p86 = pneg %p85
    $region19: #{tpu_custom_call.1} parent=1 // pred_check_branch
      %88 = sbr.rel (%p86) target = $region21
    $region20: #{tpu_custom_call.1} parent=1 // pred_region
      %v89 = vlaneseq
      %v90 = vshrl.u32 %v89, 7
      %v91 = vlaneseq
      %v92 = vand.u32 %v91, 127
      %v93 = vstv 0
      %v94 = vmul.u32 %v93, 8
      %v95 = vadd.s32 %v94, %v90
      %v96 = vmul.u32 %v95, 128
      %v97 = vadd.s32 %v96, %v92
      %vm98 = vcmp.lt.s32.totalorder %v97, 8
      %v99 = vsel %vm98, %v84, 0.0
      %v100 = vadd.f32 %v99, 0.0
      %101 = vst [vmem:[#allocation9] sm:$0xff] %v100
    $region21: #{tpu_custom_call.1} parent=1 // pred_fallthru
      _
    %p102 = scmp.ne.s32.totalorder 0, 0
    // Predicated region
    $region22: #{tpu_custom_call.1} parent=1 // pred_check
      %p103 = pneg %p102
    $region23: #{tpu_custom_call.1} parent=1 // pred_check_branch
      %105 = sbr.rel (%p103) target = $region25
    $region24: #{tpu_custom_call.1} parent=1 // pred_region
      %v106 = vadd.f32 %v84, 0.0
      %107 = vst [vmem:[#allocation9] sm:$0xff] %v106
    $region25: #{tpu_custom_call.1} parent=1 // pred_fallthru
      _
    // Predicated region
    $region26: #{tpu_custom_call.1} parent=1 // pred_check
      _
    $region27: #{tpu_custom_call.1} parent=1 // pred_check_branch
      %109 = sbr.rel (0) target = $region29
    $region28: #{tpu_custom_call.1} parent=1 // pred_region
      %s111 = ssub.s32 128, 128
      %112 = vsyncadd [#allocation6], %s111
      %s114 = sshll.u32 [#allocation9], 4
      %s115 = int_to_ptr.vmem [resolvable:$true] %s114
      %117 = dma.vmem_to_hbm [thread:$0]  %s115, 128, %s3, [#allocation6]
    $region29: #{tpu_custom_call.1} parent=1 // pred_fallthru
      _
    // Predicated region
    $region30: #{tpu_custom_call.1} parent=1 // pred_check
      _
    $region31: #{tpu_custom_call.1} parent=1 // pred_check_branch
      %119 = sbr.rel (0) target = $region33
    $region32: #{tpu_custom_call.1} parent=1 // pred_region
      %120 = dma.done [#allocation6], 128
    $region33: #{tpu_custom_call.1} parent=1 // pred_fallthru
      _
    %121 = vsyncpa [#allocation5], 1
    %122 = vsyncpa [#allocation8], 1
    %123 = vsyncpa [#allocation6], 1

</llo_original>
